<compile_context>
chip_gen: v7x
topology: tpu7x:2x2x1
jax: 0.10.0
libtpu: 0.0.40
codegen_flags: <defaults>
</compile_context>

<pallas_src>
import math

import jax
import jax.numpy as jnp
from jax import lax
from jax.experimental import pallas as pl
from jax.experimental.pallas import tpu as pltpu

EPS = 1e-5                      # PyTorch BatchNorm2d default eps
LANE = 128                      # TPU lane width
ROW_TILE = 512                  # target rows (pixels) per streamed tile
VMEM_LIMIT = 32 * 1024 * 1024   # conservative: leaves slack on v7x's 64 MiB


def _round_up(v, m):
    return (v + m - 1) // m * m


# ----------------------------- Pallas kernels ------------------------------ #

def _colsums(y):
    """(rows, C) f32 -> (2, C) stacked [sum; sum-of-squares] (one traversal)."""
    return jnp.concatenate(
        [jnp.sum(y, axis=0, keepdims=True),
         jnp.sum(y * y, axis=0, keepdims=True)], axis=0)


def _stats1_down_kernel(x_ref, w1_ref, wd_ref, s1_ref, sd_ref):
    """Pass A: stream x row-tiles; accumulate bn1 and bn_downsample stats."""
    i = pl.program_id(0)

    @pl.when(i == 0)
    def _():
        s1_ref[...] = jnp.zeros_like(s1_ref)
        sd_ref[...] = jnp.zeros_like(sd_ref)

    xb = x_ref[...].astype(jnp.bfloat16)
    y1 = jnp.dot(xb, w1_ref[...], preferred_element_type=jnp.float32)
    yd = jnp.dot(xb, wd_ref[...], preferred_element_type=jnp.float32)
    # Zero-padded rows of x contribute exactly zero to both sums.
    s1_ref[...] += _colsums(y1)
    sd_ref[...] += _colsums(yd)


def _conv1_conv2_kernel(x_ref, w1_ref, sb1_ref, w2_ref,
                        y2_ref, s2_ref, halo_ref):
    """Pass B: per-image conv1+bn1+relu fused with the 3x3 conv + bn2 stats."""
    n = pl.program_id(0)
    _, H, W, Cinp = x_ref.shape
    Pp = w1_ref.shape[1]

    @pl.when(n == 0)
    def _():
        s2_ref[...] = jnp.zeros_like(s2_ref)

    # conv1 (1x1) + bn1 + relu for this image.
    xm = x_ref[...].reshape(H * W, Cinp).astype(jnp.bfloat16)
    y1 = jnp.dot(xm, w1_ref[...], preferred_element_type=jnp.float32)
    h1 = jnp.maximum(y1 * sb1_ref[0:1, :] + sb1_ref[1:2, :], 0.0)

    # 3x3 conv (stride 1, pad 1): build h1 in a zero halo buffer in VMEM and
    # accumulate 9 shifted slice-matmuls.  No im2col matrix ever hits HBM.
    halo_ref[...] = jnp.zeros_like(halo_ref)
    halo_ref[1:H + 1, 1:W + 1, :] = h1.reshape(H, W, Pp)
    acc = jnp.zeros((H * W, Pp), jnp.float32)
    for ky in range(3):
        for kx in range(3):
            win = halo_ref[ky:ky + H, kx:kx + W, :].reshape(H * W, Pp)
            acc += jnp.dot(win.astype(jnp.bfloat16), w2_ref[ky, kx],
                           preferred_element_type=jnp.float32)

    y2_ref[...] = acc.reshape(y2_ref.shape).astype(y2_ref.dtype)
    s2_ref[...] += _colsums(acc)


def _make_stats3_kernel(m_real):
    """Pass C: stream y2, recompute h2 and conv3 rows, accumulate bn3 stats."""
    def kernel(y2_ref, sb2_ref, w3_ref, s3_ref):
        i = pl.program_id(0)
        tm = y2_ref.shape[0]

        @pl.when(i == 0)
        def _():
            s3_ref[...] = jnp.zeros_like(s3_ref)

        h2 = jnp.maximum(y2_ref[...] * sb2_ref[0:1, :] + sb2_ref[1:2, :], 0.0)
        # Zero-padded rows of y2 become `shift2` after BN; mask them so they
        # do not contaminate the bn3 batch statistics.
        row = i * tm + lax.broadcasted_iota(jnp.int32, (tm, 1), 0)
        h2 = jnp.where(row < m_real, h2, 0.0)
        y3 = jnp.dot(h2.astype(jnp.bfloat16), w3_ref[...],
                     preferred_element_type=jnp.float32)
        s3_ref[...] += _colsums(y3)
    return kernel


def _tail_kernel(y2_ref, x_ref, sb2_ref, w3_ref, sb3_ref, wd_ref, sbd_ref,
                 o_ref):
    """Pass D: bn2+relu -> conv3 -> bn3, downsample conv -> bn, add + relu."""
    h2 = jnp.maximum(y2_ref[...] * sb2_ref[0:1, :] + sb2_ref[1:2, :], 0.0)
    y3 = jnp.dot(h2.astype(jnp.bfloat16), w3_ref[...],
                 preferred_element_type=jnp.float32)
    o3 = y3 * sb3_ref[0:1, :] + sb3_ref[1:2, :]

    yd = jnp.dot(x_ref[...].astype(jnp.bfloat16), wd_ref[...],
                 preferred_element_type=jnp.float32)
    od = yd * sbd_ref[0:1, :] + sbd_ref[1:2, :]

    o_ref[...] = jnp.maximum(o3 + od, 0.0).astype(o_ref.dtype)


# ----------------------------- pallas_call glue ----------------------------- #

def _full_spec(shape):
    nd = len(shape)
    return pl.BlockSpec(shape, lambda i, _nd=nd: (0,) * _nd)


def _scale_shift(stats, gamma, beta, count):
    """(sum, sumsq) batch stats -> rows [scale; shift] of the BN affine map."""
    mean = stats[0:1, :] / count
    var = jnp.maximum(stats[1:2, :] / count - mean * mean, 0.0)
    scale = gamma * lax.rsqrt(var + EPS)
    shift = beta - mean * scale
    return jnp.concatenate([scale, shift], axis=0)


def bottleneck_smooth_forward(x_nchw, params, stride=1):
    # The module's downsample conv is stride-1, so the residual add is only
    # shape-consistent for stride == 1 (exactly like the original PyTorch code).
    assert stride == 1, "Bottleneck_smooth residual add requires stride == 1"

    N, Cin, H, W = x_nchw.shape
    w1p, w2p, w3p, wdp = params["w1p"], params["w2p"], params["w3p"], params["wdp"]
    Cinp, Pp = w1p.shape
    C4p = w3p.shape[1]
    c_out = params["c_out"]

    # NCHW -> NHWC, zero-pad channels to a lane-dense multiple of 128.
    x_nhwc = jnp.transpose(x_nchw, (0, 2, 3, 1))
    x_img = jnp.pad(x_nhwc, ((0, 0), (0, 0), (0, 0), (0, Cinp - Cin)))

    M = N * H * W
    tm = min(ROW_TILE, _round_up(M, 8))
    M_pad = _round_up(M, tm)
    grid_m = M_pad // tm
    x_mat = jnp.pad(x_img.reshape(M, Cinp), ((0, M_pad - M), (0, 0)))

    cp_arb = pltpu.CompilerParams(dimension_semantics=("arbitrary",),
                                  vmem_limit_bytes=VMEM_LIMIT)
    cp_par = pltpu.CompilerParams(dimension_semantics=("parallel",),
                                  vmem_limit_bytes=VMEM_LIMIT)

    # ---- Pass A: bn1 + bn_downsample batch statistics (streams x once). ----
    stats1, statsd = pl.pallas_call(
        _stats1_down_kernel,
        out_shape=(jax.ShapeDtypeStruct((2, Pp), jnp.float32),
                   jax.ShapeDtypeStruct((2, C4p), jnp.float32)),
        grid=(grid_m,),
        in_specs=[pl.BlockSpec((tm, Cinp), lambda i: (i, 0)),
                  _full_spec(w1p.shape),
                  _full_spec(wdp.shape)],
        out_specs=[_full_spec((2, Pp)), _full_spec((2, C4p))],
        compiler_params=cp_arb,
    )(x_mat, w1p, wdp)

    sb1 = _scale_shift(stats1, params["g1"], params["b1"], M)
    sbd = _scale_shift(statsd, params["gd"], params["bd"], M)

    # ---- Pass B: conv1+bn1+relu fused with the in-VMEM 3x3 conv, per image;
    #      also accumulates bn2 stats.  y2 (pre-bn2) is the ONLY HBM
    #      intermediate of the whole block. ----
    flops_b = N * (2 * H * W * Cinp * Pp + 9 * 2 * H * W * Pp * Pp)
    bytes_b = x_img.nbytes + N * H * W * Pp * 4 + w1p.nbytes + w2p.nbytes
    y2, stats2 = pl.pallas_call(
        _conv1_conv2_kernel,
        out_shape=(jax.ShapeDtypeStruct((N, H, W, Pp), jnp.float32),
                   jax.ShapeDtypeStruct((2, Pp), jnp.float32)),
        grid=(N,),
        in_specs=[pl.BlockSpec((1, H, W, Cinp), lambda n: (n, 0, 0, 0)),
                  _full_spec(w1p.shape),
                  _full_spec((2, Pp)),
                  _full_spec(w2p.shape)],
        out_specs=[pl.BlockSpec((1, H, W, Pp), lambda n: (n, 0, 0, 0)),
                   _full_spec((2, Pp))],
        scratch_shapes=[pltpu.VMEM((H + 2, W + 2, Pp), jnp.float32)],
        compiler_params=cp_arb,
        cost_estimate=pl.CostEstimate(flops=flops_b, transcendentals=0,
                                      bytes_accessed=bytes_b),
    )(x_img, w1p, sb1, w2p)

    sb2 = _scale_shift(stats2, params["g2"], params["b2"], M)
    y2_mat = jnp.pad(y2.reshape(M, Pp), ((0, M_pad - M), (0, 0)))

    # ---- Pass C: bn3 batch statistics (streams y2, recomputes conv3 rows). --
    stats3 = pl.pallas_call(
        _make_stats3_kernel(M),
        out_shape=jax.ShapeDtypeStruct((2, C4p), jnp.float32),
        grid=(grid_m,),
        in_specs=[pl.BlockSpec((tm, Pp), lambda i: (i, 0)),
                  _full_spec((2, Pp)),
                  _full_spec(w3p.shape)],
        out_specs=_full_spec((2, C4p)),
        compiler_params=cp_arb,
    )(y2_mat, sb2, w3p)

    sb3 = _scale_shift(stats3, params["g3"], params["b3"], M)

    # ---- Pass D: fused bn2+relu -> conv3 -> bn3, downsample conv -> bn,
    #      residual add + final relu.  Row tiles are independent -> "parallel"
    #      so the grid shards across TensorCores (v7x megacore). ----
    flops_d = 2 * M_pad * (Pp * C4p + Cinp * C4p)
    bytes_d = (y2_mat.nbytes + x_mat.nbytes + M_pad * C4p * 4
               + w3p.nbytes + wdp.nbytes)
    out_mat = pl.pallas_call(
        _tail_kernel,
        out_shape=jax.ShapeDtypeStruct((M_pad, C4p), jnp.float32),
        grid=(grid_m,),
        in_specs=[pl.BlockSpec((tm, Pp), lambda i: (i, 0)),
                  pl.BlockSpec((tm, Cinp), lambda i: (i, 0)),
                  _full_spec((2, Pp)),
                  _full_spec(w3p.shape),
                  _full_spec((2, C4p)),
                  _full_spec(wdp.shape),
                  _full_spec((2, C4p))],
        out_specs=pl.BlockSpec((tm, C4p), lambda i: (i, 0)),
        compiler_params=cp_par,
        cost_estimate=pl.CostEstimate(flops=flops_d, transcendentals=0,
                                      bytes_accessed=bytes_d),
    )(y2_mat, x_mat, sb2, w3p, sb3, wdp, sbd)

    out = out_mat[:M, :c_out].reshape(N, H, W, c_out)
    return jnp.transpose(out, (0, 3, 1, 2))  # back to NCHW


# ------------------------- parameter initialization ------------------------- #

def _init_conv_weight(key, cout, cin, k):
    # weight_init: normal(0, sqrt(2 / (kH*kW*out_channels))), OIHW layout.
    std = math.sqrt(2.0 / (k * k * cout))
    return std * jax.random.normal(key, (cout, cin, k, k), jnp.float32)


def make_params(key, inplanes, planes):
    k1, k2, k3, k4 = jax.random.split(key, 4)
    w1 = _init_conv_weight(k1, planes, inplanes, 1)
    w2 = _init_conv_weight(k2, planes, planes, 3)
    w3 = _init_conv_weight(k3, planes * 4, planes, 1)
    wd = _init_conv_weight(k4, planes * 4, inplanes, 1)

    Cinp = _round_up(inplanes, LANE)
    Pp = _round_up(planes, LANE)
    C4p = _round_up(planes * 4, LANE)

    def pad2(a, r, c):
        return jnp.pad(a, ((0, r - a.shape[0]), (0, c - a.shape[1])))

    w2t = jnp.transpose(w2, (2, 3, 1, 0))                     # (3,3,cin,cout)
    w2p = jnp.pad(w2t, ((0, 0), (0, 0),
                        (0, Pp - planes), (0, Pp - planes)))

    params = {
        # lane-padded bf16 weights (MXU operands / HBM storage)
        "w1p": pad2(jnp.transpose(w1[:, :, 0, 0]), Cinp, Pp).astype(jnp.bfloat16),
        "w2p": w2p.astype(jnp.bfloat16),
        "w3p": pad2(jnp.transpose(w3[:, :, 0, 0]), Pp, C4p).astype(jnp.bfloat16),
        "wdp": pad2(jnp.transpose(wd[:, :, 0, 0]), Cinp, C4p).astype(jnp.bfloat16),
        # BatchNorm affine params (gamma=1, beta=0 after weight_init), f32
        "g1": jnp.ones((1, Pp), jnp.float32), "b1": jnp.zeros((1, Pp), jnp.float32),
        "g2": jnp.ones((1, Pp), jnp.float32), "b2": jnp.zeros((1, Pp), jnp.float32),
        "g3": jnp.ones((1, C4p), jnp.float32), "b3": jnp.zeros((1, C4p), jnp.float32),
        "gd": jnp.ones((1, C4p), jnp.float32), "bd": jnp.zeros((1, C4p), jnp.float32),
        "c_out": planes * 4,
    }
    return params, (w1, w2, w3, wd)


# --------------------------- pure-JAX reference ----------------------------- #

def _ref_forward(x, w1, w2, w3, wd):
    def conv(x_, w_, stride, pad):
        return lax.conv_general_dilated(
            x_, w_, (stride, stride), [(pad, pad), (pad, pad)],
            dimension_numbers=("NCHW", "OIHW", "NCHW"))

    def bn(y):
        mean = jnp.mean(y, axis=(0, 2, 3), keepdims=True)
        var = jnp.mean(jnp.square(y - mean), axis=(0, 2, 3), keepdims=True)
        return (y - mean) * lax.rsqrt(var + EPS)

    out = jax.nn.relu(bn(conv(x, w1, 1, 0)))
    out = jax.nn.relu(bn(conv(out, w2, 1, 1)))
    out = bn(conv(out, w3, 1, 0))
    res = bn(conv(x, wd, 1, 0))
    return jax.nn.relu(out + res)


# ----------------------------------- main ----------------------------------- #

if __name__ == "__main__":
    key = jax.random.PRNGKey(0)
    kx, kp = jax.random.split(key)

    N, inplanes, H, W = 2, 8, 8, 8
    planes = 4  # output channels = planes * 4 = 16

    x = jax.random.normal(kx, (N, inplanes, H, W), jnp.float32)
    params, (w1, w2, w3, wd) = make_params(kp, inplanes, planes)

    out = bottleneck_smooth_forward(x, params, stride=1)
    out = jax.block_until_ready(out)

    assert out.shape == (N, planes * 4, H, W), out.shape

    ref = _ref_forward(x, w1, w2, w3, wd)
    max_err = float(jnp.max(jnp.abs(out - ref)))
    assert jnp.allclose(out, ref, rtol=5e-2, atol=5e-2), f"max abs err = {max_err}"

    print("KERNEL_OK")
</pallas_src>

<mosaic_0001>
module attributes {stable_mosaic.version = 11 : i64} {
  func.func @_stats1_down_kernel(%arg0: i32, %arg1: memref<128x128xf32, #tpu.memory_space<vmem>>, %arg2: memref<128x128xbf16, #tpu.memory_space<vmem>>, %arg3: memref<128x128xbf16, #tpu.memory_space<vmem>>, %arg4: memref<2x128xf32, #tpu.memory_space<vmem>>, %arg5: memref<2x128xf32, #tpu.memory_space<vmem>>) attributes {dimension_semantics = [#tpu.dimension_semantics<arbitrary>], iteration_bounds = array<i64: 1>, scalar_prefetch = 0 : i64, scratch_operands = 0 : i64, tpu.core_type = #tpu.core_type<tc>, window_params = [{transform_indices = @transform_0, window_bounds = array<i64: 128, 128>}, {pipeline_mode = #tpu.pipeline_mode<synchronous>, transform_indices = @transform_1, window_bounds = array<i64: 128, 128>}, {pipeline_mode = #tpu.pipeline_mode<synchronous>, transform_indices = @transform_2, window_bounds = array<i64: 128, 128>}, {pipeline_mode = #tpu.pipeline_mode<synchronous>, transform_indices = @transform_3, window_bounds = array<i64: 2, 128>}, {pipeline_mode = #tpu.pipeline_mode<synchronous>, transform_indices = @transform_4, window_bounds = array<i64: 2, 128>}]} {
    %c0_i32 = arith.constant 0 : i32
    %0 = arith.cmpi eq, %arg0, %c0_i32 : i32
    %1 = arith.extui %0 : i1 to i32
    %c0_i32_0 = arith.constant 0 : i32
    %2 = arith.cmpi ne, %1, %c0_i32_0 : i32
    scf.if %2 {
      %cst_19 = arith.constant 0.000000e+00 : f32
      %27 = vector.broadcast %cst_19 : f32 to vector<2x128xf32>
      %c0_20 = arith.constant 0 : index
      %c0_21 = arith.constant 0 : index
      %28 = vector.load %arg4[%c0_20, %c0_21] : memref<2x128xf32, #tpu.memory_space<vmem>>, vector<2x128xf32>
      tpu.vector_store %arg4[%c0_20, %c0_21], %27 {strides = array<i32>} : memref<2x128xf32, #tpu.memory_space<vmem>>, vector<2x128xf32>,
      %cst_22 = arith.constant 0.000000e+00 : f32
      %29 = vector.broadcast %cst_22 : f32 to vector<2x128xf32>
      %c0_23 = arith.constant 0 : index
      %c0_24 = arith.constant 0 : index
      %30 = vector.load %arg5[%c0_23, %c0_24] : memref<2x128xf32, #tpu.memory_space<vmem>>, vector<2x128xf32>
      tpu.vector_store %arg5[%c0_23, %c0_24], %29 {strides = array<i32>} : memref<2x128xf32, #tpu.memory_space<vmem>>, vector<2x128xf32>,
    } else {
    }
    %c0 = arith.constant 0 : index
    %c0_1 = arith.constant 0 : index
    %3 = vector.load %arg1[%c0, %c0_1] : memref<128x128xf32, #tpu.memory_space<vmem>>, vector<128x128xf32>
    %4 = arith.truncf %3 : vector<128x128xf32> to vector<128x128xbf16>
    %c0_2 = arith.constant 0 : index
    %c0_3 = arith.constant 0 : index
    %5 = vector.load %arg2[%c0_2, %c0_3] : memref<128x128xbf16, #tpu.memory_space<vmem>>, vector<128x128xbf16>
    %cst = arith.constant dense<0.000000e+00> : vector<128x128xf32>
    %6 = tpu.matmul %4, %5, %cst {dimension_numbers = #tpu.dot_dimension_numbers<[1], [0], [0], [1], [0, 0, 1, 1], [], []>} : vector<128x128xbf16>, vector<128x128xbf16>, vector<128x128xf32> -> vector<128x128xf32>
    %c0_4 = arith.constant 0 : index
    %c0_5 = arith.constant 0 : index
    %7 = vector.load %arg3[%c0_4, %c0_5] : memref<128x128xbf16, #tpu.memory_space<vmem>>, vector<128x128xbf16>
    %cst_6 = arith.constant dense<0.000000e+00> : vector<128x128xf32>
    %8 = tpu.matmul %4, %7, %cst_6 {dimension_numbers = #tpu.dot_dimension_numbers<[1], [0], [0], [1], [0, 0, 1, 1], [], []>} : vector<128x128xbf16>, vector<128x128xbf16>, vector<128x128xf32> -> vector<128x128xf32>
    %c0_7 = arith.constant 0 : index
    %c0_8 = arith.constant 0 : index
    %9 = vector.load %arg4[%c0_7, %c0_8] : memref<2x128xf32, #tpu.memory_space<vmem>>, vector<2x128xf32>
    %cst_9 = arith.constant dense<0.000000e+00> : vector<128xf32>
    %10 = vector.multi_reduction <add>, %6, %cst_9 [0] : vector<128x128xf32> to vector<128xf32>
    %11 = vector.shape_cast %10 : vector<128xf32> to vector<1x128xf32>
    %12 = arith.mulf %6, %6 : vector<128x128xf32>
    %cst_10 = arith.constant dense<0.000000e+00> : vector<128xf32>
    %13 = vector.multi_reduction <add>, %12, %cst_10 [0] : vector<128x128xf32> to vector<128xf32>
    %14 = vector.shape_cast %13 : vector<128xf32> to vector<1x128xf32>
    %15 = tpu.concatenate %11, %14 in 0 : vector<1x128xf32>, vector<1x128xf32> -> vector<2x128xf32>
    %16 = arith.addf %9, %15 : vector<2x128xf32>
    %c0_11 = arith.constant 0 : index
    %c0_12 = arith.constant 0 : index
    %17 = vector.load %arg4[%c0_11, %c0_12] : memref<2x128xf32, #tpu.memory_space<vmem>>, vector<2x128xf32>
    tpu.vector_store %arg4[%c0_11, %c0_12], %16 {strides = array<i32>} : memref<2x128xf32, #tpu.memory_space<vmem>>, vector<2x128xf32>,
    %c0_13 = arith.constant 0 : index
    %c0_14 = arith.constant 0 : index
    %18 = vector.load %arg5[%c0_13, %c0_14] : memref<2x128xf32, #tpu.memory_space<vmem>>, vector<2x128xf32>
    %cst_15 = arith.constant dense<0.000000e+00> : vector<128xf32>
    %19 = vector.multi_reduction <add>, %8, %cst_15 [0] : vector<128x128xf32> to vector<128xf32>
    %20 = vector.shape_cast %19 : vector<128xf32> to vector<1x128xf32>
    %21 = arith.mulf %8, %8 : vector<128x128xf32>
    %cst_16 = arith.constant dense<0.000000e+00> : vector<128xf32>
    %22 = vector.multi_reduction <add>, %21, %cst_16 [0] : vector<128x128xf32> to vector<128xf32>
    %23 = vector.shape_cast %22 : vector<128xf32> to vector<1x128xf32>
    %24 = tpu.concatenate %20, %23 in 0 : vector<1x128xf32>, vector<1x128xf32> -> vector<2x128xf32>
    %25 = arith.addf %18, %24 : vector<2x128xf32>
    %c0_17 = arith.constant 0 : index
    %c0_18 = arith.constant 0 : index
    %26 = vector.load %arg5[%c0_17, %c0_18] : memref<2x128xf32, #tpu.memory_space<vmem>>, vector<2x128xf32>
    tpu.vector_store %arg5[%c0_17, %c0_18], %25 {strides = array<i32>} : memref<2x128xf32, #tpu.memory_space<vmem>>, vector<2x128xf32>,
    return
  }
  func.func @transform_0(%arg0: i32) -> (i32, i32) {
    %c0_i32 = arith.constant 0 : i32
    %c0_i32_0 = arith.constant 0 : i32
    return %arg0, %c0_i32 : i32, i32
  }
  func.func @transform_1(%arg0: i32) -> (i32, i32) {
    %c0_i32 = arith.constant 0 : i32
    %c0_i32_0 = arith.constant 0 : i32
    %c0_i32_1 = arith.constant 0 : i32
    return %c0_i32, %c0_i32_0 : i32, i32
  }
  func.func @transform_2(%arg0: i32) -> (i32, i32) {
    %c0_i32 = arith.constant 0 : i32
    %c0_i32_0 = arith.constant 0 : i32
    %c0_i32_1 = arith.constant 0 : i32
    return %c0_i32, %c0_i32_0 : i32, i32
  }
  func.func @transform_3(%arg0: i32) -> (i32, i32) {
    %c0_i32 = arith.constant 0 : i32
    %c0_i32_0 = arith.constant 0 : i32
    %c0_i32_1 = arith.constant 0 : i32
    return %c0_i32, %c0_i32_0 : i32, i32
  }
  func.func @transform_4(%arg0: i32) -> (i32, i32) {
    %c0_i32 = arith.constant 0 : i32
    %c0_i32_0 = arith.constant 0 : i32
    %c0_i32_1 = arith.constant 0 : i32
    return %c0_i32, %c0_i32_0 : i32, i32
  }
}

</mosaic_0001>

<llo_original>
// kernel: tpu_custom_call.1
$region0: #{tpu_custom_call.1}
  #allocation0 [shape = 'u32[]', space=smem, size = 0x4, offset = 0x4, fixed_abs, tag = 'smem constant byte address 0x4 - core index']
  #allocation1 [shape = 'u32[144,128]{1,0:T(1,128)}', space=vmem, size = 0x12000, scoped, tag = 'internal scratch']
  %s0 = inlined_call_operand.hbm [shape: f32[128,128], index: 0, kind: input, shape index: {}]
  %s1 = inlined_call_operand.hbm [shape: bf16[128,128], index: 1, kind: input, shape index: {}]
  %s2 = inlined_call_operand.hbm [shape: bf16[128,128], index: 2, kind: input, shape index: {}]
  %s3 = inlined_call_operand.hbm [shape: f32[2,128], index: 3, kind: output, shape index: {0}]
  %s4 = inlined_call_operand.hbm [shape: f32[2,128], index: 4, kind: output, shape index: {1}]
  %5 = xla_tuple %s3, %s4
  %s6 = sld [smem:[#allocation0]]
  $region46: #{tpu_custom_call.1} parent=0
    _
  %s8 = ssub.s32 1, %s6
  %s9 = scalar_select 0, %s8, %s6
  $region1: #{tpu_custom_call.1} parent=0
    #allocation2 [shape = 'u8[65536]{0}', space=vmem, size = 0x10000, scoped, tag = 'input window, operand 0, single buffered']
    #allocation3 [shape = 's32[1]{0}', space=sflag, size = 0x4, scoped, tag = 'scoped memory for tpu_custom_call.1']
    #allocation4 [shape = 's32[1]{0}', space=sflag, size = 0x4, scoped, tag = 'scoped memory for tpu_custom_call.1']
    #allocation5 [shape = 'u8[32768]{0}', space=vmem, size = 0x8000, scoped, tag = 'input window, operand 1, single buffered']
    #allocation6 [shape = 's32[1]{0}', space=sflag, size = 0x4, scoped, tag = 'scoped memory for tpu_custom_call.1']
    #allocation7 [shape = 'u8[32768]{0}', space=vmem, size = 0x8000, scoped, tag = 'input window, operand 2, single buffered']
    #allocation8 [shape = 'u8[1024]{0}', space=vmem, size = 0x400, scoped, tag = 'output window, operand 0, single buffered']
    #allocation9 [shape = 'u8[1024]{0}', space=vmem, size = 0x400, scoped, tag = 'output window, operand 1, single buffered']
    #allocation10 [shape = 's32[1]{0}', space=sflag, size = 0x4, scoped, tag = 'scoped memory for tpu_custom_call.1']
    %10 = vsyncpa [#allocation3], 0
    %11 = vsyncpa [#allocation6], 0
    %12 = vsyncpa [#allocation4], 0
    %13 = vsyncpa [#allocation10], 0
    // Predicated region
    $region2: #{tpu_custom_call.1} parent=1 // pred_check
      _
    $region3: #{tpu_custom_call.1} parent=1 // pred_check_branch
      %15 = sbr.rel (0) target = $region5
    $region4: #{tpu_custom_call.1} parent=1 // pred_region
      %s17 = ssub.s32 2048, 2048
      %18 = vsyncadd [#allocation3], %s17
      %s19 = sshll.u32 [#allocation2], 4
      %s20 = int_to_ptr.vmem [resolvable:$true] %s19
      %25 = dma.hbm_to_vmem [thread:$0]  %s0, 2048, %s20, [#allocation3], 128, 128, 8
    $region5: #{tpu_custom_call.1} parent=1 // pred_fallthru
      _
    // Predicated region
    $region6: #{tpu_custom_call.1} parent=1 // pred_check
      _
    $region7: #{tpu_custom_call.1} parent=1 // pred_check_branch
      %27 = sbr.rel (0) target = $region9
    $region8: #{tpu_custom_call.1} parent=1 // pred_region
      %s29 = ssub.s32 1024, 1024
      %30 = vsyncadd [#allocation6], %s29
      %s31 = sshll.u32 [#allocation5], 4
      %s32 = int_to_ptr.vmem [resolvable:$true] %s31
      %37 = dma.hbm_to_vmem [thread:$0]  %s1, 1024, %s32, [#allocation6], 64, 64, 4
    $region9: #{tpu_custom_call.1} parent=1 // pred_fallthru
      _
    // Predicated region
    $region10: #{tpu_custom_call.1} parent=1 // pred_check
      _
    $region11: #{tpu_custom_call.1} parent=1 // pred_check_branch
      %39 = sbr.rel (0) target = $region13
    $region12: #{tpu_custom_call.1} parent=1 // pred_region
      %s41 = ssub.s32 1024, 1024
      %42 = vsyncadd [#allocation6], %s41
      %s43 = sshll.u32 [#allocation7], 4
      %s44 = int_to_ptr.vmem [resolvable:$true] %s43
      %49 = dma.hbm_to_vmem [thread:$0]  %s2, 1024, %s44, [#allocation6], 64, 64, 4
    $region13: #{tpu_custom_call.1} parent=1 // pred_fallthru
      _
    // Predicated region
    $region14: #{tpu_custom_call.1} parent=1 // pred_check
      _
    $region15: #{tpu_custom_call.1} parent=1 // pred_check_branch
      %51 = sbr.rel (0) target = $region17
    $region16: #{tpu_custom_call.1} parent=1 // pred_region
      %52 = dma.done [#allocation3], 2048
    $region17: #{tpu_custom_call.1} parent=1 // pred_fallthru
      _
    // Predicated region
    $region18: #{tpu_custom_call.1} parent=1 // pred_check
      _
    $region19: #{tpu_custom_call.1} parent=1 // pred_check_branch
      %54 = sbr.rel (0) target = $region21
    $region20: #{tpu_custom_call.1} parent=1 // pred_region
      %55 = dma.done [#allocation6], 1024
    $region21: #{tpu_custom_call.1} parent=1 // pred_fallthru
      _
    // Predicated region
    $region22: #{tpu_custom_call.1} parent=1 // pred_check
      _
    $region23: #{tpu_custom_call.1} parent=1 // pred_check_branch
      %57 = sbr.rel (0) target = $region25
    $region24: #{tpu_custom_call.1} parent=1 // pred_region
      %58 = dma.done [#allocation6], 1024
    $region25: #{tpu_custom_call.1} parent=1 // pred_fallthru
      _
    %p60 = scmp.eq.s32.totalorder 0, 0
    // Predicated region
    $region26: #{tpu_custom_call.1} parent=1 // pred_check
      %p61 = pneg %p60
    $region27: #{tpu_custom_call.1} parent=1 // pred_check_branch
      %63 = sbr.rel (%p61) target = $region29
    $region28: #{tpu_custom_call.1} parent=1 // pred_region
      %64 = vst [vmem:[#allocation8] sm:$0x3] 0.0
      %65 = vst [vmem:[#allocation9] sm:$0x3] 0.0
    $region29: #{tpu_custom_call.1} parent=1 // pred_fallthru
      _
    %v66 = vld [vmem:[#allocation2] sm:$0xff]
    %v67 = vld [vmem:[#allocation2 + $0x8] sm:$0xff]
    %v68 = vld [vmem:[#allocation2 + $0x10] sm:$0xff]
    %v69 = vld [vmem:[#allocation2 + $0x18] sm:$0xff]
    %v70 = vld [vmem:[#allocation2 + $0x20] sm:$0xff]
    %v71 = vld [vmem:[#allocation2 + $0x28] sm:$0xff]
    %v72 = vld [vmem:[#allocation2 + $0x30] sm:$0xff]
    %v73 = vld [vmem:[#allocation2 + $0x38] sm:$0xff]
    %v74 = vld [vmem:[#allocation2 + $0x40] sm:$0xff]
    %v75 = vld [vmem:[#allocation2 + $0x48] sm:$0xff]
    %v76 = vld [vmem:[#allocation2 + $0x50] sm:$0xff]
    %v77 = vld [vmem:[#allocation2 + $0x58] sm:$0xff]
    %v78 = vld [vmem:[#allocation2 + $0x60] sm:$0xff]
    %v79 = vld [vmem:[#allocation2 + $0x68] sm:$0xff]
    %v80 = vld [vmem:[#allocation2 + $0x70] sm:$0xff]
    %v81 = vld [vmem:[#allocation2 + $0x78] sm:$0xff]
    %v82 = vpack.c.bf16 %v67, %v66
    %v83 = vpack.c.bf16 %v69, %v68
    %v84 = vpack.c.bf16 %v71, %v70
    %v85 = vpack.c.bf16 %v73, %v72
    %v86 = vpack.c.bf16 %v75, %v74
    %v87 = vpack.c.bf16 %v77, %v76
    %v88 = vpack.c.bf16 %v79, %v78
    %v89 = vpack.c.bf16 %v81, %v80
    %v90 = vld [vmem:[#allocation5] sm:$0xf]
    %v91 = vld [vmem:[#allocation5 + $0x4] sm:$0xf]
    %v92 = vld [vmem:[#allocation5 + $0x8] sm:$0xf]
    %v93 = vld [vmem:[#allocation5 + $0xc] sm:$0xf]
    %v94 = vld [vmem:[#allocation5 + $0x10] sm:$0xf]
    %v95 = vld [vmem:[#allocation5 + $0x14] sm:$0xf]
    %v96 = vld [vmem:[#allocation5 + $0x18] sm:$0xf]
    %v97 = vld [vmem:[#allocation5 + $0x1c] sm:$0xf]
    %v98 = vld [vmem:[#allocation5 + $0x20] sm:$0xf]
    %v99 = vld [vmem:[#allocation5 + $0x24] sm:$0xf]
    %v100 = vld [vmem:[#allocation5 + $0x28] sm:$0xf]
    %v101 = vld [vmem:[#allocation5 + $0x2c] sm:$0xf]
    %v102 = vld [vmem:[#allocation5 + $0x30] sm:$0xf]
    %v103 = vld [vmem:[#allocation5 + $0x34] sm:$0xf]
    %v104 = vld [vmem:[#allocation5 + $0x38] sm:$0xf]
    %v105 = vld [vmem:[#allocation5 + $0x3c] sm:$0xf]
    %v122 = vunpack.c.l.b16 %v90
    %v123 = vunpack.c.l.b16 %v91
    %v124 = vunpack.c.l.b16 %v92
    %v125 = vunpack.c.l.b16 %v93
    %v126 = vunpack.c.l.b16 %v94
    %v127 = vunpack.c.l.b16 %v95
    %v128 = vunpack.c.l.b16 %v96
    %v129 = vunpack.c.l.b16 %v97
    %v130 = vunpack.c.l.b16 %v98
    %v131 = vunpack.c.l.b16 %v99
    %v132 = vunpack.c.l.b16 %v100
    %v133 = vunpack.c.l.b16 %v101
    %v134 = vunpack.c.l.b16 %v102
    %v135 = vunpack.c.l.b16 %v103
    %v136 = vunpack.c.l.b16 %v104
    %v137 = vunpack.c.l.b16 %v105
    %v138 = vpack.c.b16 %v123, %v122
    %v139 = vpack.c.b16 %v125, %v124
    %v140 = vpack.c.b16 %v127, %v126
    %v141 = vpack.c.b16 %v129, %v128
    %v142 = vpack.c.b16 %v131, %v130
    %v143 = vpack.c.b16 %v133, %v132
    %v144 = vpack.c.b16 %v135, %v134
    %v145 = vpack.c.b16 %v137, %v136
    %154 = vmatprep.subr.bf16.mxu0 0
    %155 = vmatpush1.bf16.msra.mxu0 %v138
    %156 = vmatprep.subr.bf16.mxu0 0
    %157 = vmatpush1.bf16.msra.mxu0 %v139
    %158 = vmatprep.subr.bf16.mxu0 0
    %159 = vmatpush1.bf16.msra.mxu0 %v140
    %160 = vmatprep.subr.bf16.mxu0 0
    %161 = vmatpush1.bf16.msra.mxu0 %v141
    %162 = vmatprep.subr.bf16.mxu0 0
    %163 = vmatpush1.bf16.msra.mxu0 %v142
    %164 = vmatprep.subr.bf16.mxu0 0
    %165 = vmatpush1.bf16.msra.mxu0 %v143
    %166 = vmatprep.subr.bf16.mxu0 0
    %167 = vmatpush1.bf16.msra.mxu0 %v144
    %168 = vmatprep.subr.bf16.mxu0 0
    %169 = vmatpush1.bf16.msra.mxu0 %v145
    %170 = vmatprep.subr.bf16.mxu0 0
    %171 = vmatpush1.bf16.msra.mxu0 0
    %172 = vmatprep.subr.bf16.mxu0 0
    %173 = vmatpush1.bf16.msra.mxu0 0
    %174 = vmatprep.subr.bf16.mxu0 0
    %175 = vmatpush1.bf16.msra.mxu0 0
    %176 = vmatprep.subr.bf16.mxu0 0
    %177 = vmatpush1.bf16.msra.mxu0 0
    %178 = vmatprep.subr.bf16.mxu0 0
    %179 = vmatpush1.bf16.msra.mxu0 0
    %180 = vmatprep.subr.bf16.mxu0 0
    %181 = vmatpush1.bf16.msra.mxu0 0
    %182 = vmatprep.subr.bf16.mxu0 0
    %183 = vmatpush1.bf16.msra.mxu0 0
    %184 = vmatprep.subr.bf16.mxu0 0
    %185 = vmatpush1.bf16.msra.mxu0 0
    %186 = vmatprep.mubr.bf16.mxu0 0
    %187 = vmatmul.mubr.bf16.gmra.mrb[0].mxu0 %v82
    %v188 = vpop.f32.mrb[0].mxu0
    %v189 = vadd.f32 0.0, %v188
    %v190 = vpop.f32.mrb[0].mxu0
    %v191 = vpop.f32.mrb[0].mxu0
    %v192 = vadd.f32 0.0, %v191
    %v193 = vpop.f32.mrb[0].mxu0
    %194 = vmatprep.mubr.bf16.mxu0 0
    %195 = vmatmul.mubr.bf16.gmra.mrb[0].mxu0 %v83
    %v196 = vpop.f32.mrb[0].mxu0
    %v197 = vadd.f32 0.0, %v196
    %v198 = vpop.f32.mrb[0].mxu0
    %v199 = vpop.f32.mrb[0].mxu0
    %v200 = vadd.f32 0.0, %v199
    %v201 = vpop.f32.mrb[0].mxu0
    %202 = vmatprep.mubr.bf16.mxu0 0
    %203 = vmatmul.mubr.bf16.gmra.mrb[0].mxu0 %v84
    %v204 = vpop.f32.mrb[0].mxu0
    %v205 = vadd.f32 0.0, %v204
    %v206 = vpop.f32.mrb[0].mxu0
    %v207 = vpop.f32.mrb[0].mxu0
    %v208 = vadd.f32 0.0, %v207
    %v209 = vpop.f32.mrb[0].mxu0
    %210 = vmatprep.mubr.bf16.mxu0 0
    %211 = vmatmul.mubr.bf16.gmra.mrb[0].mxu0 %v85
    %v212 = vpop.f32.mrb[0].mxu0
    %v213 = vadd.f32 0.0, %v212
    %v214 = vpop.f32.mrb[0].mxu0
    %v215 = vpop.f32.mrb[0].mxu0
    %v216 = vadd.f32 0.0, %v215
    %v217 = vpop.f32.mrb[0].mxu0
    %218 = vmatprep.mubr.bf16.mxu0 0
    %219 = vmatmul.mubr.bf16.gmra.mrb[0].mxu0 %v86
    %v220 = vpop.f32.mrb[0].mxu0
    %v221 = vadd.f32 0.0, %v220
    %v222 = vpop.f32.mrb[0].mxu0
    %v223 = vpop.f32.mrb[0].mxu0
    %v224 = vadd.f32 0.0, %v223
    %v225 = vpop.f32.mrb[0].mxu0
    %226 = vmatprep.mubr.bf16.mxu0 0
    %227 = vmatmul.mubr.bf16.gmra.mrb[0].mxu0 %v87
    %v228 = vpop.f32.mrb[0].mxu0
    %v229 = vadd.f32 0.0, %v228
    %v230 = vpop.f32.mrb[0].mxu0
    %v231 = vpop.f32.mrb[0].mxu0
    %v232 = vadd.f32 0.0, %v231
    %v233 = vpop.f32.mrb[0].mxu0
    %234 = vmatprep.mubr.bf16.mxu0 0
    %235 = vmatmul.mubr.bf16.gmra.mrb[0].mxu0 %v88
    %v236 = vpop.f32.mrb[0].mxu0
    %v237 = vadd.f32 0.0, %v236
    %v238 = vpop.f32.mrb[0].mxu0
    %v239 = vpop.f32.mrb[0].mxu0
    %v240 = vadd.f32 0.0, %v239
    %v241 = vpop.f32.mrb[0].mxu0
    %242 = vmatprep.mubr.bf16.mxu0 0
    %243 = vmatmul.mubr.bf16.gmra.mrb[0].mxu0 %v89
    %v244 = vpop.f32.mrb[0].mxu0
    %v245 = vadd.f32 0.0, %v244
    %v246 = vpop.f32.mrb[0].mxu0
    %v247 = vpop.f32.mrb[0].mxu0
    %v248 = vadd.f32 0.0, %v247
    %v249 = vpop.f32.mrb[0].mxu0
    %250 = vdwg.mxu0
    %v251 = vld [vmem:[#allocation7] sm:$0xf]
    %v252 = vld [vmem:[#allocation7 + $0x4] sm:$0xf]
    %v253 = vld [vmem:[#allocation7 + $0x8] sm:$0xf]
    %v254 = vld [vmem:[#allocation7 + $0xc] sm:$0xf]
    %v255 = vld [vmem:[#allocation7 + $0x10] sm:$0xf]
    %v256 = vld [vmem:[#allocation7 + $0x14] sm:$0xf]
    %v257 = vld [vmem:[#allocation7 + $0x18] sm:$0xf]
    %v258 = vld [vmem:[#allocation7 + $0x1c] sm:$0xf]
    %v259 = vld [vmem:[#allocation7 + $0x20] sm:$0xf]
    %v260 = vld [vmem:[#allocation7 + $0x24] sm:$0xf]
    %v261 = vld [vmem:[#allocation7 + $0x28] sm:$0xf]
    %v262 = vld [vmem:[#allocation7 + $0x2c] sm:$0xf]
    %v263 = vld [vmem:[#allocation7 + $0x30] sm:$0xf]
    %v264 = vld [vmem:[#allocation7 + $0x34] sm:$0xf]
    %v265 = vld [vmem:[#allocation7 + $0x38] sm:$0xf]
    %v266 = vld [vmem:[#allocation7 + $0x3c] sm:$0xf]
    %v283 = vunpack.c.l.b16 %v251
    %v284 = vunpack.c.l.b16 %v252
    %v285 = vunpack.c.l.b16 %v253
    %v286 = vunpack.c.l.b16 %v254
    %v287 = vunpack.c.l.b16 %v255
    %v288 = vunpack.c.l.b16 %v256
    %v289 = vunpack.c.l.b16 %v257
    %v290 = vunpack.c.l.b16 %v258
    %v291 = vunpack.c.l.b16 %v259
    %v292 = vunpack.c.l.b16 %v260
    %v293 = vunpack.c.l.b16 %v261
    %v294 = vunpack.c.l.b16 %v262
    %v295 = vunpack.c.l.b16 %v263
    %v296 = vunpack.c.l.b16 %v264
    %v297 = vunpack.c.l.b16 %v265
    %v298 = vunpack.c.l.b16 %v266
    %v299 = vpack.c.b16 %v284, %v283
    %v300 = vpack.c.b16 %v286, %v285
    %v301 = vpack.c.b16 %v288, %v287
    %v302 = vpack.c.b16 %v290, %v289
    %v303 = vpack.c.b16 %v292, %v291
    %v304 = vpack.c.b16 %v294, %v293
    %v305 = vpack.c.b16 %v296, %v295
    %v306 = vpack.c.b16 %v298, %v297
    %315 = vmatprep.subr.bf16.mxu0 0
    %316 = vmatpush1.bf16.msra.mxu0 %v299
    %317 = vmatprep.subr.bf16.mxu0 0
    %318 = vmatpush1.bf16.msra.mxu0 %v300
    %319 = vmatprep.subr.bf16.mxu0 0
    %320 = vmatpush1.bf16.msra.mxu0 %v301
    %321 = vmatprep.subr.bf16.mxu0 0
    %322 = vmatpush1.bf16.msra.mxu0 %v302
    %323 = vmatprep.subr.bf16.mxu0 0
    %324 = vmatpush1.bf16.msra.mxu0 %v303
    %325 = vmatprep.subr.bf16.mxu0 0
    %326 = vmatpush1.bf16.msra.mxu0 %v304
    %327 = vmatprep.subr.bf16.mxu0 0
    %328 = vmatpush1.bf16.msra.mxu0 %v305
    %329 = vmatprep.subr.bf16.mxu0 0
    %330 = vmatpush1.bf16.msra.mxu0 %v306
    %331 = vmatprep.subr.bf16.mxu0 0
    %332 = vmatpush1.bf16.msra.mxu0 0
    %333 = vmatprep.subr.bf16.mxu0 0
    %334 = vmatpush1.bf16.msra.mxu0 0
    %335 = vmatprep.subr.bf16.mxu0 0
    %336 = vmatpush1.bf16.msra.mxu0 0
    %337 = vmatprep.subr.bf16.mxu0 0
    %338 = vmatpush1.bf16.msra.mxu0 0
    %339 = vmatprep.subr.bf16.mxu0 0
    %340 = vmatpush1.bf16.msra.mxu0 0
    %341 = vmatprep.subr.bf16.mxu0 0
    %342 = vmatpush1.bf16.msra.mxu0 0
    %343 = vmatprep.subr.bf16.mxu0 0
    %344 = vmatpush1.bf16.msra.mxu0 0
    %345 = vmatprep.subr.bf16.mxu0 0
    %346 = vmatpush1.bf16.msra.mxu0 0
    %347 = vmatprep.mubr.bf16.mxu0 0
    %348 = vmatmul.mubr.bf16.gmra.mrb[0].mxu0 %v82
    %v349 = vpop.f32.mrb[0].mxu0
    %v350 = vadd.f32 0.0, %v349
    %v351 = vpop.f32.mrb[0].mxu0
    %v352 = vpop.f32.mrb[0].mxu0
    %v353 = vadd.f32 0.0, %v352
    %v354 = vpop.f32.mrb[0].mxu0
    %355 = vmatprep.mubr.bf16.mxu0 0
    %356 = vmatmul.mubr.bf16.gmra.mrb[0].mxu0 %v83
    %v357 = vpop.f32.mrb[0].mxu0
    %v358 = vadd.f32 0.0, %v357
    %v359 = vpop.f32.mrb[0].mxu0
    %v360 = vpop.f32.mrb[0].mxu0
    %v361 = vadd.f32 0.0, %v360
    %v362 = vpop.f32.mrb[0].mxu0
    %363 = vmatprep.mubr.bf16.mxu0 0
    %364 = vmatmul.mubr.bf16.gmra.mrb[0].mxu0 %v84
    %v365 = vpop.f32.mrb[0].mxu0
    %v366 = vadd.f32 0.0, %v365
    %v367 = vpop.f32.mrb[0].mxu0
    %v368 = vpop.f32.mrb[0].mxu0
    %v369 = vadd.f32 0.0, %v368
    %v370 = vpop.f32.mrb[0].mxu0
    %371 = vmatprep.mubr.bf16.mxu0 0
    %372 = vmatmul.mubr.bf16.gmra.mrb[0].mxu0 %v85
    %v373 = vpop.f32.mrb[0].mxu0
    %v374 = vadd.f32 0.0, %v373
    %v375 = vpop.f32.mrb[0].mxu0
    %v376 = vpop.f32.mrb[0].mxu0
    %v377 = vadd.f32 0.0, %v376
    %v378 = vpop.f32.mrb[0].mxu0
    %379 = vmatprep.mubr.bf16.mxu0 0
    %380 = vmatmul.mubr.bf16.gmra.mrb[0].mxu0 %v86
    %v381 = vpop.f32.mrb[0].mxu0
    %v382 = vadd.f32 0.0, %v381
    %v383 = vpop.f32.mrb[0].mxu0
    %v384 = vpop.f32.mrb[0].mxu0
    %v385 = vadd.f32 0.0, %v384
    %v386 = vpop.f32.mrb[0].mxu0
    %387 = vmatprep.mubr.bf16.mxu0 0
    %388 = vmatmul.mubr.bf16.gmra.mrb[0].mxu0 %v87
    %v389 = vpop.f32.mrb[0].mxu0
    %v390 = vadd.f32 0.0, %v389
    %v391 = vpop.f32.mrb[0].mxu0
    %v392 = vpop.f32.mrb[0].mxu0
    %v393 = vadd.f32 0.0, %v392
    %v394 = vpop.f32.mrb[0].mxu0
    %395 = vmatprep.mubr.bf16.mxu0 0
    %396 = vmatmul.mubr.bf16.gmra.mrb[0].mxu0 %v88
    %v397 = vpop.f32.mrb[0].mxu0
    %v398 = vadd.f32 0.0, %v397
    %v399 = vpop.f32.mrb[0].mxu0
    %v400 = vpop.f32.mrb[0].mxu0
    %v401 = vadd.f32 0.0, %v400
    %v402 = vpop.f32.mrb[0].mxu0
    %403 = vmatprep.mubr.bf16.mxu0 0
    %404 = vmatmul.mubr.bf16.gmra.mrb[0].mxu0 %v89
    %v405 = vpop.f32.mrb[0].mxu0
    %v406 = vadd.f32 0.0, %v405
    %v407 = vpop.f32.mrb[0].mxu0
    %v408 = vpop.f32.mrb[0].mxu0
    %v409 = vadd.f32 0.0, %v408
    %v410 = vpop.f32.mrb[0].mxu0
    %411 = vdwg.mxu0
    %v412 = vld [vmem:[#allocation8] sm:$0x3]
    %v413 = vadd.f32 %v189, %v192
    %v414 = vadd.f32 %v413, %v197
    %v415 = vadd.f32 %v414, %v200
    %v416 = vadd.f32 %v415, %v205
    %v417 = vadd.f32 %v416, %v208
    %v418 = vadd.f32 %v417, %v213
    %v419 = vadd.f32 %v418, %v216
    %v420 = vadd.f32 %v419, %v221
    %v421 = vadd.f32 %v420, %v224
    %v422 = vadd.f32 %v421, %v229
    %v423 = vadd.f32 %v422, %v232
    %v424 = vadd.f32 %v423, %v237
    %v425 = vadd.f32 %v424, %v240
    %v426 = vadd.f32 %v425, %v245
    %v427 = vadd.f32 %v426, %v248
    %v428 = vrot.slane %v427, 4
    %v429 = vadd.f32 %v427, %v428
    %v430 = vrot.slane %v429, 2
    %v431 = vadd.f32 %v429, %v430
    %v432 = vrot.slane %v431, 1
    %v433 = vadd.f32 %v431, %v432
    %v434 = vmul.f32 %v189, %v189
    %v435 = vmul.f32 %v192, %v192
    %v436 = vmul.f32 %v197, %v197
    %v437 = vmul.f32 %v200, %v200
    %v438 = vmul.f32 %v205, %v205
    %v439 = vmul.f32 %v208, %v208
    %v440 = vmul.f32 %v213, %v213
    %v441 = vmul.f32 %v216, %v216
    %v442 = vmul.f32 %v221, %v221
    %v443 = vmul.f32 %v224, %v224
    %v444 = vmul.f32 %v229, %v229
    %v445 = vmul.f32 %v232, %v232
    %v446 = vmul.f32 %v237, %v237
    %v447 = vmul.f32 %v240, %v240
    %v448 = vmul.f32 %v245, %v245
    %v449 = vmul.f32 %v248, %v248
    %v450 = vadd.f32 %v434, %v435
    %v451 = vadd.f32 %v450, %v436
    %v452 = vadd.f32 %v451, %v437
    %v453 = vadd.f32 %v452, %v438
    %v454 = vadd.f32 %v453, %v439
    %v455 = vadd.f32 %v454, %v440
    %v456 = vadd.f32 %v455, %v441
    %v457 = vadd.f32 %v456, %v442
    %v458 = vadd.f32 %v457, %v443
    %v459 = vadd.f32 %v458, %v444
    %v460 = vadd.f32 %v459, %v445
    %v461 = vadd.f32 %v460, %v446
    %v462 = vadd.f32 %v461, %v447
    %v463 = vadd.f32 %v462, %v448
    %v464 = vadd.f32 %v463, %v449
    %v465 = vrot.slane %v464, 4
    %v466 = vadd.f32 %v464, %v465
    %v467 = vrot.slane %v466, 2
    %v468 = vadd.f32 %v466, %v467
    %v469 = vrot.slane %v468, 1
    %v470 = vadd.f32 %v468, %v469
    %vm471 = vcmask 1040384
    %v472 = vsel %vm471, %v433, %v470
    %v473 = vadd.f32 %v412, %v472
    %474 = vst [vmem:[#allocation8] sm:$0x3] %v473
    %v475 = vld [vmem:[#allocation9] sm:$0x3]
    %v476 = vadd.f32 %v350, %v353
    %v477 = vadd.f32 %v476, %v358
    %v478 = vadd.f32 %v477, %v361
    %v479 = vadd.f32 %v478, %v366
    %v480 = vadd.f32 %v479, %v369
    %v481 = vadd.f32 %v480, %v374
    %v482 = vadd.f32 %v481, %v377
    %v483 = vadd.f32 %v482, %v382
    %v484 = vadd.f32 %v483, %v385
    %v485 = vadd.f32 %v484, %v390
    %v486 = vadd.f32 %v485, %v393
    %v487 = vadd.f32 %v486, %v398
    %v488 = vadd.f32 %v487, %v401
    %v489 = vadd.f32 %v488, %v406
    %v490 = vadd.f32 %v489, %v409
    %v491 = vrot.slane %v490, 4
    %v492 = vadd.f32 %v490, %v491
    %v493 = vrot.slane %v492, 2
    %v494 = vadd.f32 %v492, %v493
    %v495 = vrot.slane %v494, 1
    %v496 = vadd.f32 %v494, %v495
    %v497 = vmul.f32 %v350, %v350
    %v498 = vmul.f32 %v353, %v353
    %v499 = vmul.f32 %v358, %v358
    %v500 = vmul.f32 %v361, %v361
    %v501 = vmul.f32 %v366, %v366
    %v502 = vmul.f32 %v369, %v369
    %v503 = vmul.f32 %v374, %v374
    %v504 = vmul.f32 %v377, %v377
    %v505 = vmul.f32 %v382, %v382
    %v506 = vmul.f32 %v385, %v385
    %v507 = vmul.f32 %v390, %v390
    %v508 = vmul.f32 %v393, %v393
    %v509 = vmul.f32 %v398, %v398
    %v510 = vmul.f32 %v401, %v401
    %v511 = vmul.f32 %v406, %v406
    %v512 = vmul.f32 %v409, %v409
    %v513 = vadd.f32 %v497, %v498
    %v514 = vadd.f32 %v513, %v499
    %v515 = vadd.f32 %v514, %v500
    %v516 = vadd.f32 %v515, %v501
    %v517 = vadd.f32 %v516, %v502
    %v518 = vadd.f32 %v517, %v503
    %v519 = vadd.f32 %v518, %v504
    %v520 = vadd.f32 %v519, %v505
    %v521 = vadd.f32 %v520, %v506
    %v522 = vadd.f32 %v521, %v507
    %v523 = vadd.f32 %v522, %v508
    %v524 = vadd.f32 %v523, %v509
    %v525 = vadd.f32 %v524, %v510
    %v526 = vadd.f32 %v525, %v511
    %v527 = vadd.f32 %v526, %v512
    %v528 = vrot.slane %v527, 4
    %v529 = vadd.f32 %v527, %v528
    %v530 = vrot.slane %v529, 2
    %v531 = vadd.f32 %v529, %v530
    %v532 = vrot.slane %v531, 1
    %v533 = vadd.f32 %v531, %v532
    %v534 = vsel %vm471, %v496, %v533
    %v535 = vadd.f32 %v475, %v534
    %536 = vst [vmem:[#allocation9] sm:$0x3] %v535
    // Predicated region
    $region30: #{tpu_custom_call.1} parent=1 // pred_check
      _
    $region31: #{tpu_custom_call.1} parent=1 // pred_check_branch
      %538 = sbr.rel (0) target = $region33
    $region32: #{tpu_custom_call.1} parent=1 // pred_region
      %s540 = ssub.s32 32, 32
      %541 = vsyncadd [#allocation4], %s540
      %s543 = sshll.u32 [#allocation8], 4
      %s544 = int_to_ptr.vmem [resolvable:$true] %s543
      %546 = dma.vmem_to_hbm [thread:$0]  %s544, 32, %s3, [#allocation4]
    $region33: #{tpu_custom_call.1} parent=1 // pred_fallthru
      _
    // Predicated region
    $region34: #{tpu_custom_call.1} parent=1 // pred_check
      _
    $region35: #{tpu_custom_call.1} parent=1 // pred_check_branch
      %548 = sbr.rel (0) target = $region37
    $region36: #{tpu_custom_call.1} parent=1 // pred_region
      %s550 = ssub.s32 32, 32
      %551 = vsyncadd [#allocation10], %s550
      %s553 = sshll.u32 [#allocation9], 4
      %s554 = int_to_ptr.vmem [resolvable:$true] %s553
      %556 = dma.vmem_to_hbm [thread:$0]  %s554, 32, %s4, [#allocation10]
    $region37: #{tpu_custom_call.1} parent=1 // pred_fallthru
      _
    // Predicated region
    $region38: #{tpu_custom_call.1} parent=1 // pred_check
      _
    $region39: #{tpu_custom_call.1} parent=1 // pred_check_branch
      %558 = sbr.rel (0) target = $region41
    $region40: #{tpu_custom_call.1} parent=1 // pred_region
      %559 = dma.done [#allocation4], 32
    $region41: #{tpu_custom_call.1} parent=1 // pred_fallthru
      _
    // Predicated region
    $region42: #{tpu_custom_call.1} parent=1 // pred_check
      _
    $region43: #{tpu_custom_call.1} parent=1 // pred_check_branch
      %561 = sbr.rel (0) target = $region45
    $region44: #{tpu_custom_call.1} parent=1 // pred_region
      %562 = dma.done [#allocation10], 32
    $region45: #{tpu_custom_call.1} parent=1 // pred_fallthru
      _
    %563 = vsyncpa [#allocation3], 1
    %564 = vsyncpa [#allocation6], 1
    %565 = vsyncpa [#allocation4], 1
    %566 = vsyncpa [#allocation10], 1

</llo_original>
